<compile_context>
chip_gen: v5e
topology: v5e:2x2
jax: 0.10.0
libtpu: 0.0.40
codegen_flags: <defaults>
</compile_context>

<pallas_src>
import jax
import jax.numpy as jnp
from jax.experimental import pallas as pl
from jax.experimental.pallas import tpu as pltpu


def _round_up(x, m):
    return (x + m - 1) // m * m


def _fused_head_kernel(x_ref, w_ref, b_ref, o_ref):
    # Single fused step: ReLU (VPU) -> GEMM (MXU, f32 accum) -> bias add -> store.
    h = jnp.maximum(x_ref[...], 0.0)
    acc = jnp.dot(h, w_ref[...], preferred_element_type=jnp.float32)
    o_ref[...] = (acc + b_ref[...]).astype(o_ref.dtype)


def head_res_net(x, w1, b1, w2, b2, *, block_n=256, lane_multiple=128):
    """Head_Res_Net forward.

    x : (N, W) activations
    w1: (W, W), b1: (W,)   -- residual Linear (stored as in_features x out_features)
    w2: (W, H), b2: (H,)   -- head Linear
    """
    N, W = x.shape
    H = w2.shape[1]

    # ---- static weight fusion (done once per parameter set in real usage) ----
    w_fused = (jnp.eye(W, dtype=w1.dtype) + w1) @ w2          # (W, H)
    b_fused = b1 @ w2 + b2                                     # (H,)

    # ---- lane-dense padding of the output dimension (zero pad, static) ------
    H_pad = _round_up(H, lane_multiple)
    if H_pad != H:
        w_fused = jnp.pad(w_fused, ((0, 0), (0, H_pad - H)))
        b_fused = jnp.pad(b_fused, (0, H_pad - H))
    b_fused2d = b_fused.reshape(1, H_pad)

    # ---- batch tiling (sublane-aligned) --------------------------------------
    tn = min(block_n, _round_up(N, 8))        # multiple of 8 by construction
    N_pad = _round_up(N, tn)
    x_in = x if N_pad == N else jnp.pad(x, ((0, N_pad - N), (0, 0)))
    grid = (N_pad // tn,)

    out = pl.pallas_call(
        _fused_head_kernel,
        out_shape=jax.ShapeDtypeStruct((N_pad, H_pad), x.dtype),
        grid_spec=pltpu.PrefetchScalarGridSpec(
            num_scalar_prefetch=0,
            grid=grid,
            in_specs=[
                # activations: tiled over the batch axis (pipelined)
                pl.BlockSpec((tn, W), lambda i: (i, 0)),
                # fused weight + bias: same block every step -> VMEM resident
                pl.BlockSpec((W, H_pad), lambda i: (0, 0)),
                pl.BlockSpec((1, H_pad), lambda i: (0, 0)),
            ],
            out_specs=pl.BlockSpec((tn, H_pad), lambda i: (i, 0)),
        ),
        compiler_params=pltpu.CompilerParams(
            dimension_semantics=("parallel",),       # megacore-shardable on v7x
            vmem_limit_bytes=32 * 1024 * 1024,       # explicit; headroom on 64 MiB v7x
        ),
    )(x_in, w_fused, b_fused2d)

    if N_pad != N or H_pad != H:
        out = out[:N, :H]
    return out


def reference(x, w1, b1, w2, b2):
    # Matches the PyTorch module exactly: Linear_Res then Linear(W->H).
    h = jnp.maximum(x, 0.0)
    h2 = h + h @ w1 + b1
    return h2 @ w2 + b2


if __name__ == "__main__":
    # Small but non-trivial batch so the batch tiling / pipelining actually
    # engages (grid = (4,) with block_n=256).
    N, W, H = 1024, 32, 16

    key = jax.random.PRNGKey(0)
    kx, k1, k2, k3, k4 = jax.random.split(key, 5)

    # PyTorch-style uniform fan-in init, stored as (in_features, out_features).
    bound1 = 1.0 / jnp.sqrt(W)
    x = jax.random.normal(kx, (N, W), dtype=jnp.float32)
    w1 = jax.random.uniform(k1, (W, W), minval=-bound1, maxval=bound1, dtype=jnp.float32)
    b1 = jax.random.uniform(k2, (W,), minval=-bound1, maxval=bound1, dtype=jnp.float32)
    w2 = jax.random.uniform(k3, (W, H), minval=-bound1, maxval=bound1, dtype=jnp.float32)
    b2 = jax.random.uniform(k4, (H,), minval=-bound1, maxval=bound1, dtype=jnp.float32)

    out = head_res_net(x, w1, b1, w2, b2)
    out = jax.block_until_ready(out)

    ref = reference(x, w1, b1, w2, b2)
    assert out.shape == (N, H), f"bad shape {out.shape}"
    # Fused (I+W1)@W2 changes the f32 rounding order slightly -> 1e-4 tolerance.
    assert jnp.allclose(out, ref, atol=1e-4, rtol=1e-4), "mismatch vs reference"

    print("KERNEL_OK")
</pallas_src>

<mosaic_0001>
module attributes {stable_mosaic.version = 11 : i64} {
  func.func @_fused_head_kernel(%arg0: i32, %arg1: memref<256x32xf32, #tpu.memory_space<vmem>>, %arg2: memref<32x128xf32, #tpu.memory_space<vmem>>, %arg3: memref<1x128xf32, #tpu.memory_space<vmem>>, %arg4: memref<256x128xf32, #tpu.memory_space<vmem>>) attributes {dimension_semantics = [#tpu.dimension_semantics<parallel>], iteration_bounds = array<i64: 4>, scalar_prefetch = 0 : i64, scratch_operands = 0 : i64, tpu.core_type = #tpu.core_type<tc>, window_params = [{transform_indices = @transform_0, window_bounds = array<i64: 256, 32>}, {pipeline_mode = #tpu.pipeline_mode<synchronous>, transform_indices = @transform_1, window_bounds = array<i64: 32, 128>}, {pipeline_mode = #tpu.pipeline_mode<synchronous>, transform_indices = @transform_2, window_bounds = array<i64: 1, 128>}, {transform_indices = @transform_3, window_bounds = array<i64: 256, 128>}]} {
    %c0 = arith.constant 0 : index
    %c0_0 = arith.constant 0 : index
    %0 = vector.load %arg1[%c0, %c0_0] : memref<256x32xf32, #tpu.memory_space<vmem>>, vector<256x32xf32>
    %cst = arith.constant 0.000000e+00 : f32
    %1 = vector.broadcast %cst : f32 to vector<256x32xf32>
    %2 = arith.maximumf %0, %1 : vector<256x32xf32>
    %c0_1 = arith.constant 0 : index
    %c0_2 = arith.constant 0 : index
    %3 = vector.load %arg2[%c0_1, %c0_2] : memref<32x128xf32, #tpu.memory_space<vmem>>, vector<32x128xf32>
    %cst_3 = arith.constant dense<0.000000e+00> : vector<256x128xf32>
    %4 = tpu.matmul %2, %3, %cst_3 {dimension_numbers = #tpu.dot_dimension_numbers<[1], [0], [0], [1], [0, 0, 1, 1], [], []>} : vector<256x32xf32>, vector<32x128xf32>, vector<256x128xf32> -> vector<256x128xf32>
    %c0_4 = arith.constant 0 : index
    %c0_5 = arith.constant 0 : index
    %5 = vector.load %arg3[%c0_4, %c0_5] : memref<1x128xf32, #tpu.memory_space<vmem>>, vector<1x128xf32>
    %6 = vector.broadcast %5 : vector<1x128xf32> to vector<256x128xf32>
    %7 = arith.addf %4, %6 : vector<256x128xf32>
    %c0_6 = arith.constant 0 : index
    %c0_7 = arith.constant 0 : index
    %8 = vector.load %arg4[%c0_6, %c0_7] : memref<256x128xf32, #tpu.memory_space<vmem>>, vector<256x128xf32>
    tpu.vector_store %arg4[%c0_6, %c0_7], %7 {strides = array<i32>} : memref<256x128xf32, #tpu.memory_space<vmem>>, vector<256x128xf32>,
    return
  }
  func.func @transform_0(%arg0: i32) -> (i32, i32) {
    %c0_i32 = arith.constant 0 : i32
    %c0_i32_0 = arith.constant 0 : i32
    return %arg0, %c0_i32 : i32, i32
  }
  func.func @transform_1(%arg0: i32) -> (i32, i32) {
    %c0_i32 = arith.constant 0 : i32
    %c0_i32_0 = arith.constant 0 : i32
    %c0_i32_1 = arith.constant 0 : i32
    return %c0_i32, %c0_i32_0 : i32, i32
  }
  func.func @transform_2(%arg0: i32) -> (i32, i32) {
    %c0_i32 = arith.constant 0 : i32
    %c0_i32_0 = arith.constant 0 : i32
    %c0_i32_1 = arith.constant 0 : i32
    return %c0_i32, %c0_i32_0 : i32, i32
  }
  func.func @transform_3(%arg0: i32) -> (i32, i32) {
    %c0_i32 = arith.constant 0 : i32
    %c0_i32_0 = arith.constant 0 : i32
    return %arg0, %c0_i32 : i32, i32
  }
}

</mosaic_0001>

<llo_original>
// kernel: tpu_custom_call.1
$region0: #{tpu_custom_call.1}
  #allocation0 [shape = 'u32[]', space=smem, size = 0x4, offset = 0x4, fixed_abs, tag = 'smem constant byte address 0x4 - core index']
  #allocation1 [shape = 'u32[72,128]{1,0:T(1,128)}', space=vmem, size = 0x9000, scoped, tag = 'internal scratch']
  %s0 = inlined_call_operand.vmem [shape: f32[1024,32], index: 0, kind: input, shape index: {}]
  %s1 = inlined_call_operand.vmem [shape: f32[32,128], index: 1, kind: input, shape index: {}]
  %s2 = inlined_call_operand.vmem [shape: f32[1,128], index: 2, kind: input, shape index: {}]
  %s3 = inlined_call_operand.hbm [shape: f32[1024,128], index: 3, kind: output, shape index: {}]
  %s4 = sld [smem:[#allocation0]]
  $region45: #{tpu_custom_call.1} parent=0
    _
  %s6 = ssub.s32 1, %s4
  %s7 = scalar_select 0, %s6, %s4
  $region1: #{tpu_custom_call.1} parent=0
    #allocation2 [shape = 'u8[262144]{0}', space=vmem, size = 0x40000, scoped, tag = 'output window, operand 0']
    #allocation3 [shape = 's32[2]{0}', space=sflag, size = 0x8, scoped, tag = 'scoped memory for tpu_custom_call.1']
    %8 = vsyncpa [#allocation3], 0
    %s9 = scalar_lea.sflag [#allocation3], 1
    %10 = vsyncpa %s9, 0
    loop: start=0, step=1, limit=6
    $region2: #{tpu_custom_call.1} parent=1 // loop_pre_header
      _
    $region3: #{tpu_custom_call.1} parent=1 // loop_header
      %s12 = sphi 0, %s16
      %p13 = scmp.ge.s32.totalorder %s12, 6
      %s22 = sphi 0, %s24
      %s25 = sphi 0, %s22
      %s26 = sphi 0, %s25
      %s42 = sphi 0, %s26
      %s46 = sphi 0, %s46
      %s48 = sphi 0, %s46
      %s49 = sphi 0, %s48
      %s63 = sphi 0, %s49
      %s67 = sphi 0, %s67
      %s69 = sphi 0, %s67
      %s70 = sphi 0, %s69
      %s84 = sphi 0, %s70
      %s90 = sphi 0, %s92
      %s93 = sphi 0, %s90
      %s94 = sphi 0, %s93
      %s110 = sphi 0, %s94
    $region4: #{tpu_custom_call.1} parent=1 // loop_header_branch
      %15 = sbr.rel (%p13) target = $region8
    $region5: #{tpu_custom_call.1} parent=1 // loop_body
      %s17 = ssub.s32 %s12, 1
      %s18 = ssub.s32 %s12, 2
      %s19 = sadd.s32 %s12, 1
      %s20 = ssub.s32 %s12, %s19
      %p21 = scmp.eq.s32.totalorder %s20, 0
      %s23 = sadd.s32 %s22, 1
      %s24 = scalar_select %p21, %s22, %s23
      %p27 = pneg %p21
      %p28 = scmp.eq.s32.totalorder %s12, 3
      %p29 = por %p27, %p28
      %p30 = scmp.ne.s32.totalorder %s22, %s25
      %p31 = scmp.eq.s32.totalorder %s12, 0
      %p32 = por %p30, %p31
      %p33 = scmp.ne.s32.totalorder %s22, %s25
      %p34 = scmp.eq.s32.totalorder %s17, 3
      %p35 = por %p33, %p34
      %p36 = scmp.ne.s32.totalorder %s25, %s26
      %p37 = scmp.eq.s32.totalorder %s17, 0
      %p38 = por %p36, %p37
      %p39 = scmp.ne.s32.totalorder %s25, %s26
      %p40 = scmp.eq.s32.totalorder %s18, 3
      %p41 = por %p39, %p40
      %p43 = scmp.ne.s32.totalorder %s26, %s42
      %p44 = scmp.eq.s32.totalorder %s18, 0
      %p45 = por %p43, %p44
      %s47 = sadd.s32 %s46, 1
      %p50 = scmp.eq.s32.totalorder %s12, 3
      %p51 = scmp.ne.s32.totalorder %s46, %s48
      %p52 = scmp.eq.s32.totalorder %s12, 0
      %p53 = por %p51, %p52
      %p54 = scmp.ne.s32.totalorder %s46, %s48
      %p55 = scmp.eq.s32.totalorder %s17, 3
      %p56 = por %p54, %p55
      %p57 = scmp.ne.s32.totalorder %s48, %s49
      %p58 = scmp.eq.s32.totalorder %s17, 0
      %p59 = por %p57, %p58
      %p60 = scmp.ne.s32.totalorder %s48, %s49
      %p61 = scmp.eq.s32.totalorder %s18, 3
      %p62 = por %p60, %p61
      %p64 = scmp.ne.s32.totalorder %s49, %s63
      %p65 = scmp.eq.s32.totalorder %s18, 0
      %p66 = por %p64, %p65
      %s68 = sadd.s32 %s67, 1
      %p71 = scmp.eq.s32.totalorder %s12, 3
      %p72 = scmp.ne.s32.totalorder %s67, %s69
      %p73 = scmp.eq.s32.totalorder %s12, 0
      %p74 = por %p72, %p73
      %p75 = scmp.ne.s32.totalorder %s67, %s69
      %p76 = scmp.eq.s32.totalorder %s17, 3
      %p77 = por %p75, %p76
      %p78 = scmp.ne.s32.totalorder %s69, %s70
      %p79 = scmp.eq.s32.totalorder %s17, 0
      %p80 = por %p78, %p79
      %p81 = scmp.ne.s32.totalorder %s69, %s70
      %p82 = scmp.eq.s32.totalorder %s18, 3
      %p83 = por %p81, %p82
      %p85 = scmp.ne.s32.totalorder %s70, %s84
      %p86 = scmp.eq.s32.totalorder %s18, 0
      %p87 = por %p85, %p86
      %s88 = ssub.s32 %s12, %s19
      %p89 = scmp.eq.s32.totalorder %s88, 0
      %s91 = sadd.s32 %s90, 1
      %s92 = scalar_select %p89, %s90, %s91
      %p95 = pneg %p89
      %p96 = scmp.eq.s32.totalorder %s12, 3
      %p97 = por %p95, %p96
      %p98 = scmp.ne.s32.totalorder %s90, %s93
      %p99 = scmp.eq.s32.totalorder %s12, 0
      %p100 = por %p98, %p99
      %p101 = scmp.ne.s32.totalorder %s90, %s93
      %p102 = scmp.eq.s32.totalorder %s17, 3
      %p103 = por %p101, %p102
      %p104 = scmp.ne.s32.totalorder %s93, %s94
      %p105 = scmp.eq.s32.totalorder %s17, 0
      %p106 = por %p104, %p105
      %p107 = scmp.ne.s32.totalorder %s93, %s94
      %p108 = scmp.eq.s32.totalorder %s18, 3
      %p109 = por %p107, %p108
      %p111 = scmp.ne.s32.totalorder %s94, %s110
      %p112 = scmp.eq.s32.totalorder %s18, 0
      %p113 = por %p111, %p112
      %p114 = scmp.le.s32.totalorder 1, %s12
      %p115 = scmp.lt.s32.totalorder %s12, 5
      %p116 = pnand %p114, %p115
      %p117 = pneg %p116
      // Predicated region
      $region9: #{tpu_custom_call.1} parent=5 // pred_check
        _
      $region10: #{tpu_custom_call.1} parent=5 // pred_check_branch
        %119 = sbr.rel (%p116) target = $region12
      $region11: #{tpu_custom_call.1} parent=5 // pred_region
        %s120 = ssub.s32 %s12, 1
        // Predicated region
        $region13: #{tpu_custom_call.1} parent=11 // pred_check
          %p121 = pneg %p59
        $region14: #{tpu_custom_call.1} parent=11 // pred_check_branch
          %123 = sbr.rel (%p121) target = $region16
        $region15: #{tpu_custom_call.1} parent=11 // pred_region
          _
        $region16: #{tpu_custom_call.1} parent=11 // pred_fallthru
          _
        // Predicated region
        $region17: #{tpu_custom_call.1} parent=11 // pred_check
          %p124 = pneg %p80
        $region18: #{tpu_custom_call.1} parent=11 // pred_check_branch
          %126 = sbr.rel (%p124) target = $region20
        $region19: #{tpu_custom_call.1} parent=11 // pred_region
          _
        $region20: #{tpu_custom_call.1} parent=11 // pred_fallthru
          _
      $region12: #{tpu_custom_call.1} parent=5 // pred_fallthru
        _
      %p127 = scmp.lt.s32.totalorder %s12, 4
      // Predicated region
      $region21: #{tpu_custom_call.1} parent=5 // pred_check
        %p128 = pneg %p127
      $region22: #{tpu_custom_call.1} parent=5 // pred_check_branch
        %130 = sbr.rel (%p128) target = $region24
      $region23: #{tpu_custom_call.1} parent=5 // pred_region
        // Predicated region
        $region25: #{tpu_custom_call.1} parent=23 // pred_check
          %p131 = pneg %p32
        $region26: #{tpu_custom_call.1} parent=23 // pred_check_branch
          %133 = sbr.rel (%p131) target = $region28
        $region27: #{tpu_custom_call.1} parent=23 // pred_region
          %s134 = smul.u32 32, %s12
          %p135 = scmp.lt.s32.totalorder %s134, 127
          %s136 = scalar_select %p135, %s134, 127
          %s137 = smul.addr %s136, 8
          %s138 = scalar_lea.vmem %s0, %s137
          %s139 = smul.u32 32, %s12
        $region28: #{tpu_custom_call.1} parent=23 // pred_fallthru
          _
      $region24: #{tpu_custom_call.1} parent=5 // pred_fallthru
        _
      %p140 = scmp.le.s32.totalorder 1, %s12
      %p141 = scmp.lt.s32.totalorder %s12, 5
      %p142 = pnand %p140, %p141
      %p143 = pneg %p142
      // Predicated region
      $region29: #{tpu_custom_call.1} parent=5 // pred_check
        _
      $region30: #{tpu_custom_call.1} parent=5 // pred_check_branch
        %145 = sbr.rel (%p142) target = $region32
      $region31: #{tpu_custom_call.1} parent=5 // pred_region
        %s146 = ssub.s32 %s12, 1
        %s147 = smul.u32 32, %s17
        %p148 = scmp.lt.s32.totalorder %s147, 127
        %s149 = scalar_select %p148, %s147, 127
        %s150 = smul.addr %s149, 8
        %s151 = scalar_lea.vmem %s0, %s150
        %p152 = pneg %p38
        %p153 = pneg %p35
        %p154 = pneg %p59
        %p155 = pneg %p56
        %p156 = pneg %p80
        %p157 = pneg %p77
        %p158 = pneg %p106
        %p159 = pneg %p103
        %s160 = sand.u32 %s93, 1
        %s161 = scalar_lea.sflag [#allocation3], %s160
        %s162 = sand.u32 %s93, 1
        %s163 = smul.addr %s162, 256
        %s164 = scalar_lea.vmem [#allocation2], %s163
        %s165 = smul.u32 32, %s17
        %p166 = scmp.lt.s32.totalorder %s165, 127
        %s167 = scalar_select %p166, %s165, 127
        %s168 = smul.addr %s167, 8
        %s169 = scalar_lea.vmem %s0, %s168
        %s170 = smul.u32 32, %s17
        %s171 = smul.u32 32, %s17
        %v172 = vld [vmem:[%s169] sm:$0xff]
        %v173 = vld [vmem:[%s169 + $0x8] sm:$0xff]
        %v174 = vld [vmem:[%s169 + $0x10] sm:$0xff]
        %v175 = vld [vmem:[%s169 + $0x18] sm:$0xff]
        %v176 = vld [vmem:[%s169 + $0x20] sm:$0xff]
        %v177 = vld [vmem:[%s169 + $0x28] sm:$0xff]
        %v178 = vld [vmem:[%s169 + $0x30] sm:$0xff]
        %v179 = vld [vmem:[%s169 + $0x38] sm:$0xff]
        %v180 = vld [vmem:[%s169 + $0x40] sm:$0xff]
        %v181 = vld [vmem:[%s169 + $0x48] sm:$0xff]
        %v182 = vld [vmem:[%s169 + $0x50] sm:$0xff]
        %v183 = vld [vmem:[%s169 + $0x58] sm:$0xff]
        %v184 = vld [vmem:[%s169 + $0x60] sm:$0xff]
        %v185 = vld [vmem:[%s169 + $0x68] sm:$0xff]
        %v186 = vld [vmem:[%s169 + $0x70] sm:$0xff]
        %v187 = vld [vmem:[%s169 + $0x78] sm:$0xff]
        %v188 = vld [vmem:[%s169 + $0x80] sm:$0xff]
        %v189 = vld [vmem:[%s169 + $0x88] sm:$0xff]
        %v190 = vld [vmem:[%s169 + $0x90] sm:$0xff]
        %v191 = vld [vmem:[%s169 + $0x98] sm:$0xff]
        %v192 = vld [vmem:[%s169 + $0xa0] sm:$0xff]
        %v193 = vld [vmem:[%s169 + $0xa8] sm:$0xff]
        %v194 = vld [vmem:[%s169 + $0xb0] sm:$0xff]
        %v195 = vld [vmem:[%s169 + $0xb8] sm:$0xff]
        %v196 = vld [vmem:[%s169 + $0xc0] sm:$0xff]
        %v197 = vld [vmem:[%s169 + $0xc8] sm:$0xff]
        %v198 = vld [vmem:[%s169 + $0xd0] sm:$0xff]
        %v199 = vld [vmem:[%s169 + $0xd8] sm:$0xff]
        %v200 = vld [vmem:[%s169 + $0xe0] sm:$0xff]
        %v201 = vld [vmem:[%s169 + $0xe8] sm:$0xff]
        %v202 = vld [vmem:[%s169 + $0xf0] sm:$0xff]
        %v203 = vld [vmem:[%s169 + $0xf8] sm:$0xff]
        %v204 = vmax.f32 %v172, 0.0
        %v205 = vmax.f32 %v173, 0.0
        %v206 = vmax.f32 %v174, 0.0
        %v207 = vmax.f32 %v175, 0.0
        %v208 = vmax.f32 %v176, 0.0
        %v209 = vmax.f32 %v177, 0.0
        %v210 = vmax.f32 %v178, 0.0
        %v211 = vmax.f32 %v179, 0.0
        %v212 = vmax.f32 %v180, 0.0
        %v213 = vmax.f32 %v181, 0.0
        %v214 = vmax.f32 %v182, 0.0
        %v215 = vmax.f32 %v183, 0.0
        %v216 = vmax.f32 %v184, 0.0
        %v217 = vmax.f32 %v185, 0.0
        %v218 = vmax.f32 %v186, 0.0
        %v219 = vmax.f32 %v187, 0.0
        %v220 = vmax.f32 %v188, 0.0
        %v221 = vmax.f32 %v189, 0.0
        %v222 = vmax.f32 %v190, 0.0
        %v223 = vmax.f32 %v191, 0.0
        %v224 = vmax.f32 %v192, 0.0
        %v225 = vmax.f32 %v193, 0.0
        %v226 = vmax.f32 %v194, 0.0
        %v227 = vmax.f32 %v195, 0.0
        %v228 = vmax.f32 %v196, 0.0
        %v229 = vmax.f32 %v197, 0.0
        %v230 = vmax.f32 %v198, 0.0
        %v231 = vmax.f32 %v199, 0.0
        %v232 = vmax.f32 %v200, 0.0
        %v233 = vmax.f32 %v201, 0.0
        %v234 = vmax.f32 %v202, 0.0
        %v235 = vmax.f32 %v203, 0.0
        %v236 = vld [vmem:[%s1] sm:$0xff]
        %v237 = vld [vmem:[%s1 + $0x8] sm:$0xff]
        %v238 = vld [vmem:[%s1 + $0x10] sm:$0xff]
        %v239 = vld [vmem:[%s1 + $0x18] sm:$0xff]
        %v240 = vld [vmem:[%s2] sm:$0x1]
        %v242 = vperm.slane %v240, 0
        %vm244 = vcmask 261120
        %v246 = vsel %vm244, %v204, 0
        %v249 = vsel %vm244, %v205, 0
        %v252 = vsel %vm244, %v206, 0
        %v255 = vsel %vm244, %v207, 0
        %v258 = vsel %vm244, %v208, 0
        %v261 = vsel %vm244, %v209, 0
        %v264 = vsel %vm244, %v210, 0
        %v267 = vsel %vm244, %v211, 0
        %v270 = vsel %vm244, %v212, 0
        %v273 = vsel %vm244, %v213, 0
        %v276 = vsel %vm244, %v214, 0
        %v279 = vsel %vm244, %v215, 0
        %v282 = vsel %vm244, %v216, 0
        %v285 = vsel %vm244, %v217, 0
        %v288 = vsel %vm244, %v218, 0
        %v291 = vsel %vm244, %v219, 0
        %v294 = vsel %vm244, %v220, 0
        %v297 = vsel %vm244, %v221, 0
        %v300 = vsel %vm244, %v222, 0
        %v303 = vsel %vm244, %v223, 0
        %v306 = vsel %vm244, %v224, 0
        %v309 = vsel %vm244, %v225, 0
        %v312 = vsel %vm244, %v226, 0
        %v315 = vsel %vm244, %v227, 0
        %v318 = vsel %vm244, %v228, 0
        %v321 = vsel %vm244, %v229, 0
        %v324 = vsel %vm244, %v230, 0
        %v327 = vsel %vm244, %v231, 0
        %v330 = vsel %vm244, %v232, 0
        %v333 = vsel %vm244, %v233, 0
        %v336 = vsel %vm244, %v234, 0
        %v339 = vsel %vm244, %v235, 0
        %341 = vmatpush.msra.mxu0 0.0
        %342 = vmatpush.msra.mxu0 0.0
        %343 = vmatpush.msra.mxu0 0.0
        %344 = vmatpush.msra.mxu0 0.0
        %345 = vmatpush.msra.mxu0 0.0
        %346 = vmatpush.msra.mxu0 0.0
        %347 = vmatpush.msra.mxu0 0.0
        %348 = vmatpush.msra.mxu0 0.0
        %349 = vmatpush.msra.mxu0 0.0
        %350 = vmatpush.msra.mxu0 0.0
        %351 = vmatpush.msra.mxu0 0.0
        %352 = vmatpush.msra.mxu0 0.0
        %353 = vmatpush.msra.mxu0 %v239
        %354 = vmatpush.msra.mxu0 %v238
        %355 = vmatpush.msra.mxu0 %v237
        %356 = vmatpush.msra.mxu0 %v236
        %357 = vmatmul.f32.gmra.mxu0 %v246
        %v358 = vpop.f32.mrf.mxu0
        %v359 = vadd.f32 %v242, %v358
        %360 = vmatmul.f32.gmra.mxu0 %v249
        %v361 = vpop.f32.mrf.mxu0
        %v362 = vadd.f32 %v242, %v361
        %363 = vmatmul.f32.gmra.mxu0 %v252
        %v364 = vpop.f32.mrf.mxu0
        %v365 = vadd.f32 %v242, %v364
        %366 = vmatmul.f32.gmra.mxu0 %v255
        %v367 = vpop.f32.mrf.mxu0
        %v368 = vadd.f32 %v242, %v367
        %369 = vmatmul.f32.gmra.mxu0 %v258
        %v370 = vpop.f32.mrf.mxu0
        %v371 = vadd.f32 %v242, %v370
        %372 = vmatmul.f32.gmra.mxu0 %v261
        %v373 = vpop.f32.mrf.mxu0
        %v374 = vadd.f32 %v242, %v373
        %375 = vmatmul.f32.gmra.mxu0 %v264
        %v376 = vpop.f32.mrf.mxu0
        %v377 = vadd.f32 %v242, %v376
        %378 = vmatmul.f32.gmra.mxu0 %v267
        %v379 = vpop.f32.mrf.mxu0
        %v380 = vadd.f32 %v242, %v379
        %381 = vmatmul.f32.gmra.mxu0 %v270
        %v382 = vpop.f32.mrf.mxu0
        %v383 = vadd.f32 %v242, %v382
        %384 = vmatmul.f32.gmra.mxu0 %v273
        %v385 = vpop.f32.mrf.mxu0
        %v386 = vadd.f32 %v242, %v385
        %387 = vmatmul.f32.gmra.mxu0 %v276
        %v388 = vpop.f32.mrf.mxu0
        %v389 = vadd.f32 %v242, %v388
        %390 = vmatmul.f32.gmra.mxu0 %v279
        %v391 = vpop.f32.mrf.mxu0
        %v392 = vadd.f32 %v242, %v391
        %393 = vmatmul.f32.gmra.mxu0 %v282
        %v394 = vpop.f32.mrf.mxu0
        %v395 = vadd.f32 %v242, %v394
        %396 = vmatmul.f32.gmra.mxu0 %v285
        %v397 = vpop.f32.mrf.mxu0
        %v398 = vadd.f32 %v242, %v397
        %399 = vmatmul.f32.gmra.mxu0 %v288
        %v400 = vpop.f32.mrf.mxu0
        %v401 = vadd.f32 %v242, %v400
        %402 = vmatmul.f32.gmra.mxu0 %v291
        %v403 = vpop.f32.mrf.mxu0
        %v404 = vadd.f32 %v242, %v403
        %405 = vmatmul.f32.gmra.mxu0 %v294
        %v406 = vpop.f32.mrf.mxu0
        %v407 = vadd.f32 %v242, %v406
        %408 = vmatmul.f32.gmra.mxu0 %v297
        %v409 = vpop.f32.mrf.mxu0
        %v410 = vadd.f32 %v242, %v409
        %411 = vmatmul.f32.gmra.mxu0 %v300
        %v412 = vpop.f32.mrf.mxu0
        %v413 = vadd.f32 %v242, %v412
        %414 = vmatmul.f32.gmra.mxu0 %v303
        %v415 = vpop.f32.mrf.mxu0
        %v416 = vadd.f32 %v242, %v415
        %417 = vmatmul.f32.gmra.mxu0 %v306
        %v418 = vpop.f32.mrf.mxu0
        %v419 = vadd.f32 %v242, %v418
        %420 = vmatmul.f32.gmra.mxu0 %v309
        %v421 = vpop.f32.mrf.mxu0
        %v422 = vadd.f32 %v242, %v421
        %423 = vmatmul.f32.gmra.mxu0 %v312
        %v424 = vpop.f32.mrf.mxu0
        %v425 = vadd.f32 %v242, %v424
        %426 = vmatmul.f32.gmra.mxu0 %v315
        %v427 = vpop.f32.mrf.mxu0
        %v428 = vadd.f32 %v242, %v427
        %429 = vmatmul.f32.gmra.mxu0 %v318
        %v430 = vpop.f32.mrf.mxu0
        %v431 = vadd.f32 %v242, %v430
        %432 = vmatmul.f32.gmra.mxu0 %v321
        %v433 = vpop.f32.mrf.mxu0
        %v434 = vadd.f32 %v242, %v433
        %435 = vmatmul.f32.gmra.mxu0 %v324
        %v436 = vpop.f32.mrf.mxu0
        %v437 = vadd.f32 %v242, %v436
        %438 = vmatmul.f32.gmra.mxu0 %v327
        %v439 = vpop.f32.mrf.mxu0
        %v440 = vadd.f32 %v242, %v439
        %441 = vmatmul.f32.gmra.mxu0 %v330
        %v442 = vpop.f32.mrf.mxu0
        %v443 = vadd.f32 %v242, %v442
        %444 = vmatmul.f32.gmra.mxu0 %v333
        %v445 = vpop.f32.mrf.mxu0
        %v446 = vadd.f32 %v242, %v445
        %447 = vmatmul.f32.gmra.mxu0 %v336
        %v448 = vpop.f32.mrf.mxu0
        %v449 = vadd.f32 %v242, %v448
        %450 = vmatmul.f32.gmra.mxu0 %v339
        %v451 = vpop.f32.mrf.mxu0
        %v452 = vadd.f32 %v242, %v451
        %453 = vdwg.mxu0
        %454 = vst [vmem:[%s164] sm:$0xff] %v359
        %455 = vst [vmem:[%s164 + $0x8] sm:$0xff] %v362
        %456 = vst [vmem:[%s164 + $0x10] sm:$0xff] %v365
        %457 = vst [vmem:[%s164 + $0x18] sm:$0xff] %v368
        %458 = vst [vmem:[%s164 + $0x20] sm:$0xff] %v371
        %459 = vst [vmem:[%s164 + $0x28] sm:$0xff] %v374
        %460 = vst [vmem:[%s164 + $0x30] sm:$0xff] %v377
        %461 = vst [vmem:[%s164 + $0x38] sm:$0xff] %v380
        %462 = vst [vmem:[%s164 + $0x40] sm:$0xff] %v383
        %463 = vst [vmem:[%s164 + $0x48] sm:$0xff] %v386
        %464 = vst [vmem:[%s164 + $0x50] sm:$0xff] %v389
        %465 = vst [vmem:[%s164 + $0x58] sm:$0xff] %v392
        %466 = vst [vmem:[%s164 + $0x60] sm:$0xff] %v395
        %467 = vst [vmem:[%s164 + $0x68] sm:$0xff] %v398
        %468 = vst [vmem:[%s164 + $0x70] sm:$0xff] %v401
        %469 = vst [vmem:[%s164 + $0x78] sm:$0xff] %v404
        %470 = vst [vmem:[%s164 + $0x80] sm:$0xff] %v407
        %471 = vst [vmem:[%s164 + $0x88] sm:$0xff] %v410
        %472 = vst [vmem:[%s164 + $0x90] sm:$0xff] %v413
        %473 = vst [vmem:[%s164 + $0x98] sm:$0xff] %v416
        %474 = vst [vmem:[%s164 + $0xa0] sm:$0xff] %v419
        %475 = vst [vmem:[%s164 + $0xa8] sm:$0xff] %v422
        %476 = vst [vmem:[%s164 + $0xb0] sm:$0xff] %v425
        %477 = vst [vmem:[%s164 + $0xb8] sm:$0xff] %v428
        %478 = vst [vmem:[%s164 + $0xc0] sm:$0xff] %v431
        %479 = vst [vmem:[%s164 + $0xc8] sm:$0xff] %v434
        %480 = vst [vmem:[%s164 + $0xd0] sm:$0xff] %v437
        %481 = vst [vmem:[%s164 + $0xd8] sm:$0xff] %v440
        %482 = vst [vmem:[%s164 + $0xe0] sm:$0xff] %v443
        %483 = vst [vmem:[%s164 + $0xe8] sm:$0xff] %v446
        %484 = vst [vmem:[%s164 + $0xf0] sm:$0xff] %v449
        %485 = vst [vmem:[%s164 + $0xf8] sm:$0xff] %v452
        %s486 = sand.u32 %s93, 1
        %s487 = scalar_lea.sflag [#allocation3], %s486
        %s488 = sand.u32 %s93, 1
        %s489 = smul.addr %s488, 256
        %s490 = scalar_lea.vmem [#allocation2], %s489
        // Predicated region
        $region33: #{tpu_custom_call.1} parent=31 // pred_check
          %p491 = pneg %p103
        $region34: #{tpu_custom_call.1} parent=31 // pred_check_branch
          %493 = sbr.rel (%p491) target = $region36
        $region35: #{tpu_custom_call.1} parent=31 // pred_region
          %s494 = smul.u32 32, %s17
          %496 = vsyncadd %s487, 0
          %s497 = smul.addr %s494, 8
          %s498 = scalar_lea.hbm %s3, %s497
          %s499 = sshll.u32 %s490, 4
          %s500 = int_to_ptr.vmem [resolvable:$true] %s499
          %s501 = sshll.u32 %s498, 4
          %s502 = int_to_ptr.hbm [resolvable:$true] %s501
          %507 = dma.vmem_to_hbm [thread:$0]  %s500, 4096, %s502, %s487, 128, 128, 8
        $region36: #{tpu_custom_call.1} parent=31 // pred_fallthru
          _
      $region32: #{tpu_custom_call.1} parent=5 // pred_fallthru
        _
      %p508 = scmp.le.s32.totalorder 2, %s12
      // Predicated region
      $region37: #{tpu_custom_call.1} parent=5 // pred_check
        %p509 = pneg %p508
      $region38: #{tpu_custom_call.1} parent=5 // pred_check_branch
        %511 = sbr.rel (%p509) target = $region40
      $region39: #{tpu_custom_call.1} parent=5 // pred_region
        %s512 = ssub.s32 %s12, 2
        // Predicated region
        $region41: #{tpu_custom_call.1} parent=39 // pred_check
          %p513 = pneg %p109
        $region42: #{tpu_custom_call.1} parent=39 // pred_check_branch
          %515 = sbr.rel (%p513) target = $region44
        $region43: #{tpu_custom_call.1} parent=39 // pred_region
          %s516 = sand.u32 %s94, 1
          %s517 = scalar_lea.sflag [#allocation3], %s516
          %s518 = sand.u32 %s94, 1
          %s519 = smul.addr %s518, 256
          %s520 = scalar_lea.vmem [#allocation2], %s519
          %522 = dma.done %s517, 4096
        $region44: #{tpu_custom_call.1} parent=39 // pred_fallthru
          _
      $region40: #{tpu_custom_call.1} parent=5 // pred_fallthru
        _
    $region6: #{tpu_custom_call.1} parent=1 // loop_footer
      %s16 = sadd.s32 1, %s12
    $region7: #{tpu_custom_call.1} parent=1 // loop_footer_branch
      %11 = sbr.rel target = $region3
    $region8: #{tpu_custom_call.1} parent=1 // loop_exit
      _
    %523 = vsyncpa [#allocation3], 1
    %s524 = scalar_lea.sflag [#allocation3], 1
    %525 = vsyncpa %s524, 1

</llo_original>
